<compile_context>
chip_gen: v6e
topology: v6e:2x2x1
jax: 0.10.0
libtpu: 0.0.40
codegen_flags: <defaults>
</compile_context>

<pallas_src>
import functools

import jax
import jax.numpy as jnp
from jax.experimental import pallas as pl
from jax.experimental.pallas import tpu as pltpu

_MIB = 1024 * 1024


def _rmsnorm_kernel(x_ref, w_ref, o_ref, *, eps: float):
    # x_ref: (tile_rows, dim)   w_ref: (1, dim)   o_ref: (tile_rows, dim)
    g = 1.0 + w_ref[...].astype(jnp.float32)              # hoisted, once per step
    xf = x_ref[...].astype(jnp.float32)                   # x.float()
    ms = jnp.mean(xf * xf, axis=-1, keepdims=True)        # mean(x^2, -1)
    inv = jax.lax.rsqrt(ms + eps)                         # rsqrt(. + eps)  (EUP)
    # Re-read/re-cast x for the apply so the reduction's fp32 copy need not
    # stay live across the whole body.
    y = x_ref[...].astype(jnp.float32) * (inv * g)        # _norm(x) * (1 + w)
    o_ref[...] = y.astype(o_ref.dtype)                    # .type_as(x)


def _sublane_align(dtype) -> int:
    itemsize = jnp.dtype(dtype).itemsize
    if itemsize >= 4:
        return 8
    if itemsize == 2:
        return 16
    return 32


def _round_up(n: int, m: int) -> int:
    return ((n + m - 1) // m) * m


def _round_down_aligned(n: int, m: int) -> int:
    return (n // m) * m


def _vmem_capacity_bytes() -> int:
    """Physical VMEM for the current generation; conservative fallback."""
    try:
        return int(pltpu.get_tpu_info().vmem_capacity_bytes)
    except Exception:
        return 64 * _MIB  # assume the smallest (v7x-like) if query fails


def _budgets_for_generation():
    cap = _vmem_capacity_bytes()
    if cap >= 100 * _MIB:
        # v5e / v6e: 128 MiB physical VMEM.
        return 48 * _MIB, 96 * _MIB   # (pipelined-footprint budget, vmem_limit cap)
    # v7x (64 MiB physical) or unknown: leave headroom for compiler scratch.
    return 32 * _MIB, 48 * _MIB


def _choose_tile_rows(rows: int, dim: int, dtype, footprint_budget: int) -> int:
    """Largest sublane-aligned row tile whose pipelined footprint fits budget."""
    itemsize = jnp.dtype(dtype).itemsize
    align = _sublane_align(dtype)

    # Live VMEM per row of a block while the pipeline runs:
    #   2 double-buffered input blocks + 2 output blocks (input dtype)
    #   + ~2 fp32 temporaries of the block inside the body.
    per_row_bytes = dim * (4 * itemsize + 2 * 4)
    max_rows_by_vmem = max(
        align, _round_down_aligned(footprint_budget // per_row_bytes, align))

    # Aim for roughly 4 MiB of *input* data per block (HBM-bandwidth bound),
    # with a generous row cap so small-dim inputs still reach multi-MiB blocks.
    target_rows = max(
        align, _round_down_aligned((4 * _MIB) // max(1, dim * itemsize), align))
    tile = min(max_rows_by_vmem, target_rows, 4096)

    # No point tiling larger than the (aligned) row count.
    tile = min(tile, _round_up(rows, align))
    tile = max(tile, align)

    # Guarantee >= 2 grid steps whenever possible: a 1-step grid starves one of
    # v7x's two TensorCores and eliminates all DMA/compute overlap.
    while tile > align and pl.cdiv(rows, tile) < 2:
        tile = max(align, _round_down_aligned(tile // 2, align))
    return tile


def rmsnorm(x, weight, eps: float = 1e-6, *, tile_rows: int | None = None):
    """RMSNorm over the last axis of x, matching the PyTorch module forward."""
    dim = x.shape[-1]
    assert weight.shape == (dim,)
    lead = x.shape[:-1]
    rows = 1
    for s in lead:
        rows *= s
    x2d = x.reshape(rows, dim)
    w2d = weight.reshape(1, dim)

    itemsize = jnp.dtype(x.dtype).itemsize
    align = _sublane_align(x.dtype)
    footprint_budget, vmem_cap = _budgets_for_generation()

    if tile_rows is None:
        tile_rows = _choose_tile_rows(rows, dim, x.dtype, footprint_budget)
    else:
        tile_rows = max(align, _round_up(int(tile_rows), align))

    # Ragged grid over the UNPADDED rows: Pallas masks the last partial block
    # (OOB reads land in garbage rows whose outputs are dropped on writeback;
    # each row's reduction is fully contained in its own row, so valid rows
    # are never contaminated).
    grid = (pl.cdiv(rows, tile_rows),)

    # Explicit scoped-VMEM limit consistent with the tile budget:
    # 2x(in block) + 2x(out block) + ~2 fp32 temp blocks + weight, with 2x
    # headroom, floored at 32 MiB (v5e default is only 16 MiB) and capped per
    # generation (96 MiB on 128-MiB chips, 48 MiB on v7x's 64 MiB).
    block_in_bytes = tile_rows * dim * itemsize
    footprint = 4 * block_in_bytes + 2 * tile_rows * dim * 4 + dim * 4
    vmem_limit = int(min(max(2 * footprint, 32 * _MIB), vmem_cap))

    cost = pl.CostEstimate(
        flops=4 * rows * dim,
        transcendentals=rows,
        bytes_accessed=2 * rows * dim * itemsize + dim * 4,
    )

    out2d = pl.pallas_call(
        functools.partial(_rmsnorm_kernel, eps=eps),
        out_shape=jax.ShapeDtypeStruct((rows, dim), x.dtype),
        grid_spec=pltpu.PrefetchScalarGridSpec(
            num_scalar_prefetch=0,
            grid=grid,
            in_specs=[
                pl.BlockSpec((tile_rows, dim), lambda i: (i, 0)),
                pl.BlockSpec((1, dim), lambda i: (0, 0)),   # resident weight
            ],
            out_specs=pl.BlockSpec((tile_rows, dim), lambda i: (i, 0)),
        ),
        compiler_params=pltpu.CompilerParams(
            dimension_semantics=("parallel",),
            vmem_limit_bytes=vmem_limit,
        ),
        cost_estimate=cost,
    )(x2d, w2d)

    return out2d.reshape(*lead, dim)


def rmsnorm_ref(x, weight, eps: float = 1e-6):
    """Pure-JAX reference mirroring the PyTorch forward."""
    xf = x.astype(jnp.float32)
    inv = jax.lax.rsqrt(jnp.mean(xf * xf, axis=-1, keepdims=True) + eps)
    out = xf * inv * (1.0 + weight.astype(jnp.float32))
    return out.astype(x.dtype)


if __name__ == "__main__":
    key = jax.random.PRNGKey(0)
    kx, kw, kx2, kw2 = jax.random.split(key, 4)

    # Case 1: small canonical shape (batch=2, seq=8, dim=32), bf16 input.
    batch, seq, dim = 2, 8, 32
    x = jax.random.normal(kx, (batch, seq, dim), dtype=jnp.bfloat16)
    weight = 0.1 * jax.random.normal(kw, (dim,), dtype=jnp.float32)

    out = jax.block_until_ready(rmsnorm(x, weight, eps=1e-6))
    ref = rmsnorm_ref(x, weight, eps=1e-6)
    assert out.shape == x.shape and out.dtype == x.dtype
    assert jnp.allclose(out.astype(jnp.float32), ref.astype(jnp.float32),
                        atol=2e-2, rtol=2e-2)

    # Case 2: row count not a multiple of the tile (exercises the ragged
    # last-block path with no pad/slice), f32 input.
    batch2, seq2, dim2 = 3, 5, 128
    x2 = jax.random.normal(kx2, (batch2, seq2, dim2), dtype=jnp.float32)
    weight2 = 0.1 * jax.random.normal(kw2, (dim2,), dtype=jnp.float32)

    out2 = jax.block_until_ready(rmsnorm(x2, weight2, eps=1e-6))
    ref2 = rmsnorm_ref(x2, weight2, eps=1e-6)
    assert out2.shape == x2.shape and out2.dtype == x2.dtype
    assert jnp.allclose(out2, ref2, atol=1e-5, rtol=1e-5)

    # Case 3: larger shape with a forced small tile to exercise a multi-step
    # parallel grid and the resident-weight block.
    batch3, seq3, dim3 = 4, 96, 256
    x3 = jax.random.normal(kx, (batch3, seq3, dim3), dtype=jnp.bfloat16)
    weight3 = 0.1 * jax.random.normal(kw, (dim3,), dtype=jnp.float32)
    out3 = jax.block_until_ready(rmsnorm(x3, weight3, eps=1e-6, tile_rows=64))
    ref3 = rmsnorm_ref(x3, weight3, eps=1e-6)
    assert jnp.allclose(out3.astype(jnp.float32), ref3.astype(jnp.float32),
                        atol=2e-2, rtol=2e-2)

    print("KERNEL_OK")
</pallas_src>

<mosaic_0001>
module attributes {stable_mosaic.version = 11 : i64} {
  func.func @_rmsnorm_kernel(%arg0: i32, %arg1: memref<16x32xbf16, #tpu.memory_space<vmem>>, %arg2: memref<1x32xf32, #tpu.memory_space<vmem>>, %arg3: memref<16x32xbf16, #tpu.memory_space<vmem>>) attributes {dimension_semantics = [#tpu.dimension_semantics<parallel>], iteration_bounds = array<i64: 1>, scalar_prefetch = 0 : i64, scratch_operands = 0 : i64, tpu.core_type = #tpu.core_type<tc>, window_params = [{transform_indices = @transform_0, window_bounds = array<i64: 16, 32>}, {pipeline_mode = #tpu.pipeline_mode<synchronous>, transform_indices = @transform_1, window_bounds = array<i64: 1, 32>}, {transform_indices = @transform_2, window_bounds = array<i64: 16, 32>}]} {
    %c0 = arith.constant 0 : index
    %c0_0 = arith.constant 0 : index
    %0 = vector.load %arg2[%c0, %c0_0] : memref<1x32xf32, #tpu.memory_space<vmem>>, vector<1x32xf32>
    %cst = arith.constant 1.000000e+00 : f32
    %1 = vector.broadcast %cst : f32 to vector<1x32xf32>
    %2 = arith.addf %1, %0 : vector<1x32xf32>
    %c0_1 = arith.constant 0 : index
    %c0_2 = arith.constant 0 : index
    %3 = vector.load %arg1[%c0_1, %c0_2] : memref<16x32xbf16, #tpu.memory_space<vmem>>, vector<16x32xbf16>
    %4 = arith.extf %3 : vector<16x32xbf16> to vector<16x32xf32>
    %5 = arith.mulf %4, %4 : vector<16x32xf32>
    %cst_3 = arith.constant dense<0.000000e+00> : vector<16xf32>
    %6 = vector.multi_reduction <add>, %5, %cst_3 [1] : vector<16x32xf32> to vector<16xf32>
    %7 = vector.shape_cast %6 : vector<16xf32> to vector<16x1xf32>
    %cst_4 = arith.constant 3.200000e+01 : f32
    %8 = vector.broadcast %cst_4 : f32 to vector<16x1xf32>
    %9 = arith.divf %7, %8 : vector<16x1xf32>
    %cst_5 = arith.constant 9.99999997E-7 : f32
    %10 = vector.broadcast %cst_5 : f32 to vector<16x1xf32>
    %11 = arith.addf %9, %10 : vector<16x1xf32>
    %12 = math.rsqrt %11 : vector<16x1xf32>
    %c0_6 = arith.constant 0 : index
    %c0_7 = arith.constant 0 : index
    %13 = vector.load %arg1[%c0_6, %c0_7] : memref<16x32xbf16, #tpu.memory_space<vmem>>, vector<16x32xbf16>
    %14 = arith.extf %13 : vector<16x32xbf16> to vector<16x32xf32>
    %15 = vector.broadcast %12 : vector<16x1xf32> to vector<16x32xf32>
    %16 = vector.broadcast %2 : vector<1x32xf32> to vector<16x32xf32>
    %17 = arith.mulf %15, %16 : vector<16x32xf32>
    %18 = arith.mulf %14, %17 : vector<16x32xf32>
    %19 = arith.truncf %18 : vector<16x32xf32> to vector<16x32xbf16>
    %c0_8 = arith.constant 0 : index
    %c0_9 = arith.constant 0 : index
    %20 = vector.load %arg3[%c0_8, %c0_9] : memref<16x32xbf16, #tpu.memory_space<vmem>>, vector<16x32xbf16>
    tpu.vector_store %arg3[%c0_8, %c0_9], %19 {strides = array<i32>} : memref<16x32xbf16, #tpu.memory_space<vmem>>, vector<16x32xbf16>,
    return
  }
  func.func @transform_0(%arg0: i32) -> (i32, i32) {
    %c0_i32 = arith.constant 0 : i32
    %c0_i32_0 = arith.constant 0 : i32
    return %arg0, %c0_i32 : i32, i32
  }
  func.func @transform_1(%arg0: i32) -> (i32, i32) {
    %c0_i32 = arith.constant 0 : i32
    %c0_i32_0 = arith.constant 0 : i32
    %c0_i32_1 = arith.constant 0 : i32
    return %c0_i32, %c0_i32_0 : i32, i32
  }
  func.func @transform_2(%arg0: i32) -> (i32, i32) {
    %c0_i32 = arith.constant 0 : i32
    %c0_i32_0 = arith.constant 0 : i32
    return %arg0, %c0_i32 : i32, i32
  }
}

</mosaic_0001>

<llo_original>
// kernel: tpu_custom_call.1
$region0: #{tpu_custom_call.1}
  #allocation0 [shape = 'u32[]', space=smem, size = 0x4, offset = 0x4, fixed_abs, tag = 'smem constant byte address 0x4 - core index']
  #allocation1 [shape = 'u32[144,128]{1,0:T(1,128)}', space=vmem, size = 0x12000, scoped, tag = 'internal scratch']
  %s0 = inlined_call_operand.hbm [shape: bf16[16,32], index: 0, kind: input, shape index: {}]
  %s1 = inlined_call_operand.vmem [shape: f32[1,32], index: 1, kind: input, shape index: {}]
  %s2 = inlined_call_operand.hbm [shape: bf16[16,32], index: 2, kind: output, shape index: {}]
  %s3 = sld [smem:[#allocation0]]
  $region22: #{tpu_custom_call.1} parent=0
    _
  %s5 = ssub.s32 1, %s3
  %s6 = scalar_select 0, %s5, %s3
  $region1: #{tpu_custom_call.1} parent=0
    #allocation2 [shape = 'u8[4096]{0}', space=vmem, size = 0x1000, scoped, tag = 'input window, operand 0, single buffered']
    #allocation3 [shape = 's32[1]{0}', space=sflag, size = 0x4, scoped, tag = 'scoped memory for tpu_custom_call.1']
    #allocation4 [shape = 's32[1]{0}', space=sflag, size = 0x4, scoped, tag = 'scoped memory for tpu_custom_call.1']
    #allocation5 [shape = 'u8[4096]{0}', space=vmem, size = 0x1000, scoped, tag = 'output window, operand 0, single buffered']
    %7 = vsyncpa [#allocation3], 0
    %8 = vsyncpa [#allocation4], 0
    // Predicated region
    $region2: #{tpu_custom_call.1} parent=1 // pred_check
      _
    $region3: #{tpu_custom_call.1} parent=1 // pred_check_branch
      %10 = sbr.rel (0) target = $region5
    $region4: #{tpu_custom_call.1} parent=1 // pred_region
      %s12 = ssub.s32 128, 128
      %13 = vsyncadd [#allocation3], %s12
      %s14 = sshll.u32 [#allocation2], 4
      %s15 = int_to_ptr.vmem [resolvable:$true] %s14
      %20 = dma.hbm_to_vmem [thread:$0]  %s0, 128, %s15, [#allocation3], 64, 64, 4
    $region5: #{tpu_custom_call.1} parent=1 // pred_fallthru
      _
    // Predicated region
    $region6: #{tpu_custom_call.1} parent=1 // pred_check
      _
    $region7: #{tpu_custom_call.1} parent=1 // pred_check_branch
      %22 = sbr.rel (0) target = $region9
    $region8: #{tpu_custom_call.1} parent=1 // pred_region
      _
    $region9: #{tpu_custom_call.1} parent=1 // pred_fallthru
      _
    // Predicated region
    $region10: #{tpu_custom_call.1} parent=1 // pred_check
      _
    $region11: #{tpu_custom_call.1} parent=1 // pred_check_branch
      %24 = sbr.rel (0) target = $region13
    $region12: #{tpu_custom_call.1} parent=1 // pred_region
      %25 = dma.done [#allocation3], 128
    $region13: #{tpu_custom_call.1} parent=1 // pred_fallthru
      _
    %v26 = vld [vmem:[%s1] sm:$0x1]
    %v27 = vadd.f32 %v26, 1.0
    %v28 = vld [vmem:[#allocation2] sm:$0xf]
    %v29 = vld [vmem:[#allocation2 + $0x4] sm:$0xf]
    %v30 = vunpack.c.l.bf16 %v28
    %v31 = vunpack.c.l.bf16 %v29
    %v32 = vmul.f32 %v30, %v30
    %v33 = vmul.f32 %v31, %v31
    %vm34 = vcmask 261120
    %v35 = vsel %vm34, %v32, 0.0
    %36 = vadd.xlane.f32.xlu0 %v35
    %v37 = vpop.xlane.xlu0 %36
    %v38 = vsel %vm34, %v33, 0.0
    %39 = vadd.xlane.f32.xlu0 %v38
    %v40 = vpop.xlane.xlu0 %39
    %v41 = vrcp.pop 32.0
    %v42 = vmul.f32 %v37, %v41
    %v43 = vmul.f32 %v40, %v41
    %v44 = vadd.f32 %v42, 1e-06
    %v45 = vadd.f32 %v43, 1e-06
    %v46 = vrsqrt.pop %v44
    %v47 = vrsqrt.pop %v45
    %v49 = vlaneseq
    %v50 = vshrl.u32 %v49, 7
    %v51 = vsub.s32 0, %v50
    %v52 = vrot.slane %v27, %v51
    %v54 = vmul.f32 %v46, %v52
    %v55 = vmul.f32 %v47, %v52
    %v56 = vmul.f32 %v30, %v54
    %v57 = vmul.f32 %v31, %v55
    %v58 = vpack.c.bf16 %v57, %v56
    %v60 = vunpack.c.l.b16 %v58
    %v61 = vunpack.c.h.b16 %v58
    %v62 = vpack.c.b16 %v60, %v60
    %v63 = vpack.c.b16 %v61, %v61
    %vm66 = vcmask 257024
    %67 = vst.msk [vmem:[#allocation5] sm:$0xf] %vm66, %v62
    %68 = vst.msk [vmem:[#allocation5 + $0x4] sm:$0xf] %vm66, %v63
    // Predicated region
    $region14: #{tpu_custom_call.1} parent=1 // pred_check
      _
    $region15: #{tpu_custom_call.1} parent=1 // pred_check_branch
      %70 = sbr.rel (0) target = $region17
    $region16: #{tpu_custom_call.1} parent=1 // pred_region
      %s72 = ssub.s32 128, 128
      %73 = vsyncadd [#allocation4], %s72
      %s74 = sshll.u32 [#allocation5], 4
      %s75 = int_to_ptr.vmem [resolvable:$true] %s74
      %80 = dma.vmem_to_hbm [thread:$0]  %s75, 128, %s2, [#allocation4], 64, 64, 4
    $region17: #{tpu_custom_call.1} parent=1 // pred_fallthru
      _
    // Predicated region
    $region18: #{tpu_custom_call.1} parent=1 // pred_check
      _
    $region19: #{tpu_custom_call.1} parent=1 // pred_check_branch
      %82 = sbr.rel (0) target = $region21
    $region20: #{tpu_custom_call.1} parent=1 // pred_region
      %83 = dma.done [#allocation4], 128
    $region21: #{tpu_custom_call.1} parent=1 // pred_fallthru
      _
    %84 = vsyncpa [#allocation3], 1
    %85 = vsyncpa [#allocation4], 1

</llo_original>
